<compile_context>
chip_gen: v5e
topology: v5e:2x2
jax: 0.10.0
libtpu: 0.0.40
codegen_flags: <defaults>
</compile_context>

<pallas_src>
import functools
import math

import jax
import jax.numpy as jnp
from jax.experimental import pallas as pl
from jax.experimental.pallas import tpu as pltpu

LOG_2PI = math.log(2.0 * math.pi)
PDF_MIN = 1e-12

LANES = 128
MAX_TILE_ROWS = 1024          # (1024, 128) f32 tile = 512 KiB
SPLIT_MIN_BYTES = 512 * 1024  # only split the grid on 2-TC chips above this slab size


def _single_cdf_flow_kernel(params_ref, x_ref, out_ref, *, k):
    """Mixture-of-Gaussians log-density on one (tile_rows, 128) f32 tile.

    params_ref is a (4, k) SMEM array:
      row 0: a_i  = w_i * exp(-(log_sigma_i + 0.5*log(2*pi)))   (weighted normalizer)
      row 1: mu_i
      row 2: c_i  = -0.5 / sigma_i^2                            (-0.5 folded in)
      row 3: t_i  = w_i * 1e-12                                 (folded clip threshold)
    """
    x = x_ref[...]                                   # (tile_rows, 128) f32, VMEM
    acc_a = jnp.zeros_like(x)
    acc_b = jnp.zeros_like(x)
    for i in range(k):                               # k static -> fully unrolled
        a_i = params_ref[0, i]
        mu_i = params_ref[1, i]
        c_i = params_ref[2, i]
        t_i = params_ref[3, i]
        d = x - mu_i                                 # VPU
        term = jnp.maximum(a_i * jnp.exp((d * d) * c_i), t_i)   # EUP exp + VPU
        if i % 2 == 0:                               # two accumulators break the add chain
            acc_a = acc_a + term
        else:
            acc_b = acc_b + term
    out_ref[...] = jnp.log(acc_a + acc_b)


def _num_tensorcores():
    """Best-effort TensorCore-per-chip count (v7x = 2, earlier gens = 1)."""
    try:
        kind = jax.devices()[0].device_kind.lower()
    except Exception:
        return 1
    return 2 if "7" in kind else 1


def _plan_tile_rows(R, num_tcs):
    """Row-tile size for an (R, 128) slab.

    1-TC chips / small slabs: one full-extent block (no per-step overhead).
    2-TC chips with a large slab: an even number of equal-size parallel steps
    so megacore sharding keeps both TensorCores busy.
    """
    slab_bytes = R * LANES * 4
    if num_tcs >= 2 and slab_bytes > SPLIT_MIN_BYTES:
        steps = 2 * pl.cdiv(R, 2 * MAX_TILE_ROWS)          # even step count
        tile = ((pl.cdiv(R, steps) + 7) // 8) * 8           # (8,128) alignment
        return min(R, max(8, tile))
    return R if R <= MAX_TILE_ROWS else MAX_TILE_ROWS


def single_cdf_flow_forward(X, w_logit, mu, log_sigma):
    """JAX wrapper reproducing SingleCDFFlow.forward(X) -> (log_px, 0, log_det)."""
    assert X.ndim == 2 and X.shape[1] == 1, "expected X of shape (N, 1)"
    k = int(w_logit.shape[0])
    N = X.shape[0]

    # ---- parameter preprocessing (tiny (k,)-sized glue, plain JAX) ----------
    w = jax.nn.softmax(w_logit.astype(jnp.float32))
    log_sigma_f = log_sigma.astype(jnp.float32)
    a = w * jnp.exp(-(log_sigma_f + 0.5 * LOG_2PI))    # w_i / (sigma_i * sqrt(2*pi))
    c = -0.5 * jnp.exp(-2.0 * log_sigma_f)             # -0.5 / sigma_i^2 (fold the -0.5)
    t = w * PDF_MIN                                    # clip threshold scaled by w_i
    params = jnp.stack([a, mu.astype(jnp.float32), c, t], axis=0)   # (4, k) -> SMEM

    # ---- lay X out as a lane-dense (R, 128) slab ----------------------------
    padded = (N % LANES) != 0
    if padded:
        # Ragged-N fallback: one pad pass + one slice pass over a mem-bound kernel.
        # TODO(synk): a truly copy-free ragged path needs a manual-DMA tail kernel;
        # not worth it for a <=127-element remainder.
        flat = jnp.pad(X.reshape(-1).astype(jnp.float32), (0, (-N) % LANES))
    else:
        # Fast path: pure-metadata reshape, no HBM copy.
        flat = X.astype(jnp.float32).reshape(-1)
    R = flat.shape[0] // LANES
    slab = flat.reshape(R, LANES)

    tile_rows = _plan_tile_rows(R, _num_tensorcores())
    grid = (pl.cdiv(R, tile_rows),)   # ragged last block handled by masked writeback

    kernel = functools.partial(_single_cdf_flow_kernel, k=k)
    out_slab = pl.pallas_call(
        kernel,
        out_shape=jax.ShapeDtypeStruct((R, LANES), jnp.float32),
        grid_spec=pltpu.PrefetchScalarGridSpec(
            num_scalar_prefetch=0,
            grid=grid,
            in_specs=[
                pl.BlockSpec(memory_space=pltpu.MemorySpace.SMEM),          # params (4, k)
                pl.BlockSpec((tile_rows, LANES), lambda i: (i, 0)),         # X slab
            ],
            out_specs=pl.BlockSpec((tile_rows, LANES), lambda i: (i, 0)),
        ),
        compiler_params=pltpu.CompilerParams(
            dimension_semantics=("parallel",)),
    )(params, slab)

    if padded:
        log_px = out_slab.reshape(-1)[:N].reshape(N, 1)
    else:
        log_px = out_slab.reshape(N, 1)               # metadata-only reshape
    log_det = log_px
    # forward() returns (log_px, 0, log_det); z / cdf from flow() is unused there.
    return log_px, 0, log_det


if __name__ == "__main__":
    key = jax.random.PRNGKey(0)
    k = 4
    N = 2048   # multiple of 128 -> fast (copy-free) path; ragged N also supported

    kx, kw, kmu, ks = jax.random.split(key, 4)
    X = 2.0 * jax.random.normal(kx, (N, 1), dtype=jnp.float32)
    w_logit = jax.random.normal(kw, (k,), dtype=jnp.float32)
    mu = jax.random.normal(kmu, (k,), dtype=jnp.float32)
    log_sigma = jax.random.normal(ks, (k,), dtype=jnp.float32)

    log_px, zero, log_det = single_cdf_flow_forward(X, w_logit, mu, log_sigma)
    jax.block_until_ready(log_px)

    # Pure-JAX reference of the PyTorch forward pass.
    w_ref = jax.nn.softmax(w_logit)
    sigma_ref = jnp.exp(log_sigma)
    lp = -0.5 * ((X - mu) / sigma_ref) ** 2 - log_sigma - 0.5 * LOG_2PI
    pdf_ref = jnp.clip(jnp.exp(lp), PDF_MIN, None)
    ref = jnp.log(jnp.sum(w_ref * pdf_ref, axis=1, keepdims=True))

    assert log_px.shape == (N, 1)
    assert zero == 0
    assert jnp.allclose(log_px, ref, rtol=1e-5, atol=1e-5)
    assert jnp.allclose(log_det, ref, rtol=1e-5, atol=1e-5)
    print("KERNEL_OK")
</pallas_src>

<mosaic_0001>
module attributes {stable_mosaic.version = 11 : i64} {
  func.func @_single_cdf_flow_kernel(%arg0: i32, %arg1: memref<4x4xf32, #tpu.memory_space<smem>>, %arg2: memref<16x128xf32, #tpu.memory_space<vmem>>, %arg3: memref<16x128xf32, #tpu.memory_space<vmem>>) attributes {dimension_semantics = [#tpu.dimension_semantics<parallel>], iteration_bounds = array<i64: 1>, scalar_prefetch = 0 : i64, scratch_operands = 0 : i64, tpu.core_type = #tpu.core_type<tc>, window_params = [{transform_indices = @transform_0, window_bounds = array<i64: 4, 4>}, {transform_indices = @transform_1, window_bounds = array<i64: 16, 128>}, {transform_indices = @transform_2, window_bounds = array<i64: 16, 128>}]} {
    %c0 = arith.constant 0 : index
    %c0_0 = arith.constant 0 : index
    %0 = vector.load %arg2[%c0, %c0_0] : memref<16x128xf32, #tpu.memory_space<vmem>>, vector<16x128xf32>
    %cst = arith.constant 0.000000e+00 : f32
    %1 = vector.broadcast %cst : f32 to vector<16x128xf32>
    %cst_1 = arith.constant 0.000000e+00 : f32
    %2 = vector.broadcast %cst_1 : f32 to vector<16x128xf32>
    %c0_2 = arith.constant 0 : index
    %c0_3 = arith.constant 0 : index
    %3 = memref.load %arg1[%c0_2, %c0_3] : memref<4x4xf32, #tpu.memory_space<smem>>
    %c1 = arith.constant 1 : index
    %c0_4 = arith.constant 0 : index
    %4 = memref.load %arg1[%c1, %c0_4] : memref<4x4xf32, #tpu.memory_space<smem>>
    %c2 = arith.constant 2 : index
    %c0_5 = arith.constant 0 : index
    %5 = memref.load %arg1[%c2, %c0_5] : memref<4x4xf32, #tpu.memory_space<smem>>
    %c3 = arith.constant 3 : index
    %c0_6 = arith.constant 0 : index
    %6 = memref.load %arg1[%c3, %c0_6] : memref<4x4xf32, #tpu.memory_space<smem>>
    %7 = vector.broadcast %4 : f32 to vector<16x128xf32>
    %8 = arith.subf %0, %7 : vector<16x128xf32>
    %9 = arith.mulf %8, %8 : vector<16x128xf32>
    %10 = vector.broadcast %5 : f32 to vector<16x128xf32>
    %11 = arith.mulf %9, %10 : vector<16x128xf32>
    %12 = math.exp %11 : vector<16x128xf32>
    %13 = vector.broadcast %3 : f32 to vector<16x128xf32>
    %14 = arith.mulf %13, %12 : vector<16x128xf32>
    %15 = vector.broadcast %6 : f32 to vector<16x128xf32>
    %16 = arith.maximumf %14, %15 : vector<16x128xf32>
    %17 = arith.addf %1, %16 : vector<16x128xf32>
    %c0_7 = arith.constant 0 : index
    %c1_8 = arith.constant 1 : index
    %18 = memref.load %arg1[%c0_7, %c1_8] : memref<4x4xf32, #tpu.memory_space<smem>>
    %c1_9 = arith.constant 1 : index
    %c1_10 = arith.constant 1 : index
    %19 = memref.load %arg1[%c1_9, %c1_10] : memref<4x4xf32, #tpu.memory_space<smem>>
    %c2_11 = arith.constant 2 : index
    %c1_12 = arith.constant 1 : index
    %20 = memref.load %arg1[%c2_11, %c1_12] : memref<4x4xf32, #tpu.memory_space<smem>>
    %c3_13 = arith.constant 3 : index
    %c1_14 = arith.constant 1 : index
    %21 = memref.load %arg1[%c3_13, %c1_14] : memref<4x4xf32, #tpu.memory_space<smem>>
    %22 = vector.broadcast %19 : f32 to vector<16x128xf32>
    %23 = arith.subf %0, %22 : vector<16x128xf32>
    %24 = arith.mulf %23, %23 : vector<16x128xf32>
    %25 = vector.broadcast %20 : f32 to vector<16x128xf32>
    %26 = arith.mulf %24, %25 : vector<16x128xf32>
    %27 = math.exp %26 : vector<16x128xf32>
    %28 = vector.broadcast %18 : f32 to vector<16x128xf32>
    %29 = arith.mulf %28, %27 : vector<16x128xf32>
    %30 = vector.broadcast %21 : f32 to vector<16x128xf32>
    %31 = arith.maximumf %29, %30 : vector<16x128xf32>
    %32 = arith.addf %2, %31 : vector<16x128xf32>
    %c0_15 = arith.constant 0 : index
    %c2_16 = arith.constant 2 : index
    %33 = memref.load %arg1[%c0_15, %c2_16] : memref<4x4xf32, #tpu.memory_space<smem>>
    %c1_17 = arith.constant 1 : index
    %c2_18 = arith.constant 2 : index
    %34 = memref.load %arg1[%c1_17, %c2_18] : memref<4x4xf32, #tpu.memory_space<smem>>
    %c2_19 = arith.constant 2 : index
    %c2_20 = arith.constant 2 : index
    %35 = memref.load %arg1[%c2_19, %c2_20] : memref<4x4xf32, #tpu.memory_space<smem>>
    %c3_21 = arith.constant 3 : index
    %c2_22 = arith.constant 2 : index
    %36 = memref.load %arg1[%c3_21, %c2_22] : memref<4x4xf32, #tpu.memory_space<smem>>
    %37 = vector.broadcast %34 : f32 to vector<16x128xf32>
    %38 = arith.subf %0, %37 : vector<16x128xf32>
    %39 = arith.mulf %38, %38 : vector<16x128xf32>
    %40 = vector.broadcast %35 : f32 to vector<16x128xf32>
    %41 = arith.mulf %39, %40 : vector<16x128xf32>
    %42 = math.exp %41 : vector<16x128xf32>
    %43 = vector.broadcast %33 : f32 to vector<16x128xf32>
    %44 = arith.mulf %43, %42 : vector<16x128xf32>
    %45 = vector.broadcast %36 : f32 to vector<16x128xf32>
    %46 = arith.maximumf %44, %45 : vector<16x128xf32>
    %47 = arith.addf %17, %46 : vector<16x128xf32>
    %c0_23 = arith.constant 0 : index
    %c3_24 = arith.constant 3 : index
    %48 = memref.load %arg1[%c0_23, %c3_24] : memref<4x4xf32, #tpu.memory_space<smem>>
    %c1_25 = arith.constant 1 : index
    %c3_26 = arith.constant 3 : index
    %49 = memref.load %arg1[%c1_25, %c3_26] : memref<4x4xf32, #tpu.memory_space<smem>>
    %c2_27 = arith.constant 2 : index
    %c3_28 = arith.constant 3 : index
    %50 = memref.load %arg1[%c2_27, %c3_28] : memref<4x4xf32, #tpu.memory_space<smem>>
    %c3_29 = arith.constant 3 : index
    %c3_30 = arith.constant 3 : index
    %51 = memref.load %arg1[%c3_29, %c3_30] : memref<4x4xf32, #tpu.memory_space<smem>>
    %52 = vector.broadcast %49 : f32 to vector<16x128xf32>
    %53 = arith.subf %0, %52 : vector<16x128xf32>
    %54 = arith.mulf %53, %53 : vector<16x128xf32>
    %55 = vector.broadcast %50 : f32 to vector<16x128xf32>
    %56 = arith.mulf %54, %55 : vector<16x128xf32>
    %57 = math.exp %56 : vector<16x128xf32>
    %58 = vector.broadcast %48 : f32 to vector<16x128xf32>
    %59 = arith.mulf %58, %57 : vector<16x128xf32>
    %60 = vector.broadcast %51 : f32 to vector<16x128xf32>
    %61 = arith.maximumf %59, %60 : vector<16x128xf32>
    %62 = arith.addf %32, %61 : vector<16x128xf32>
    %63 = arith.addf %47, %62 : vector<16x128xf32>
    %64 = math.log %63 : vector<16x128xf32>
    %c0_31 = arith.constant 0 : index
    %c0_32 = arith.constant 0 : index
    %65 = vector.load %arg3[%c0_31, %c0_32] : memref<16x128xf32, #tpu.memory_space<vmem>>, vector<16x128xf32>
    tpu.vector_store %arg3[%c0_31, %c0_32], %64 {strides = array<i32>} : memref<16x128xf32, #tpu.memory_space<vmem>>, vector<16x128xf32>,
    return
  }
  func.func @transform_0(%arg0: i32) -> (i32, i32) {
    %c0_i32 = arith.constant 0 : i32
    %c0_i32_0 = arith.constant 0 : i32
    %c0_i32_1 = arith.constant 0 : i32
    return %c0_i32, %c0_i32_0 : i32, i32
  }
  func.func @transform_1(%arg0: i32) -> (i32, i32) {
    %c0_i32 = arith.constant 0 : i32
    %c0_i32_0 = arith.constant 0 : i32
    return %arg0, %c0_i32 : i32, i32
  }
  func.func @transform_2(%arg0: i32) -> (i32, i32) {
    %c0_i32 = arith.constant 0 : i32
    %c0_i32_0 = arith.constant 0 : i32
    return %arg0, %c0_i32 : i32, i32
  }
}

</mosaic_0001>

<llo_original>
// kernel: tpu_custom_call.1
$region0: #{tpu_custom_call.1}
  #allocation0 [shape = 'u32[]', space=smem, size = 0x4, offset = 0x4, fixed_abs, tag = 'smem constant byte address 0x4 - core index']
  #allocation1 [shape = 'u32[72,128]{1,0:T(1,128)}', space=vmem, size = 0x9000, scoped, tag = 'internal scratch']
  %s0 = inlined_call_operand.hbm [shape: f32[4,4], index: 0, kind: input, shape index: {}]
  %s1 = inlined_call_operand.hbm [shape: f32[16,128], index: 1, kind: input, shape index: {}]
  %s2 = inlined_call_operand.hbm [shape: f32[16,128], index: 2, kind: output, shape index: {}]
  %s3 = sld [smem:[#allocation0]]
  $region26: #{tpu_custom_call.1} parent=0
    _
  %s5 = ssub.s32 1, %s3
  %s6 = scalar_select 0, %s5, %s3
  $region1: #{tpu_custom_call.1} parent=0
    #allocation2 [shape = 'u8[2048]{0}', space=smem, size = 0x800, scoped, tag = 'input window, operand 0, single buffered']
    #allocation3 [shape = 's32[1]{0}', space=sflag, size = 0x4, scoped, tag = 'scoped memory for tpu_custom_call.1']
    #allocation4 [shape = 's32[1]{0}', space=sflag, size = 0x4, scoped, tag = 'scoped memory for tpu_custom_call.1']
    #allocation5 [shape = 's32[1]{0}', space=sflag, size = 0x4, scoped, tag = 'scoped memory for tpu_custom_call.1']
    #allocation6 [shape = 'u8[8192]{0}', space=vmem, size = 0x2000, scoped, tag = 'input window, operand 1, single buffered']
    #allocation7 [shape = 'u8[8192]{0}', space=vmem, size = 0x2000, scoped, tag = 'output window, operand 0, single buffered']
    %7 = vsyncpa [#allocation5], 0
    %8 = vsyncpa [#allocation3], 0
    %9 = vsyncpa [#allocation4], 0
    // Predicated region
    $region2: #{tpu_custom_call.1} parent=1 // pred_check
      _
    $region3: #{tpu_custom_call.1} parent=1 // pred_check_branch
      %11 = sbr.rel (0) target = $region5
    $region4: #{tpu_custom_call.1} parent=1 // pred_region
      %13 = vsyncadd [#allocation5], 0
      %s15 = sshll.u32 %s0, 4
      %s16 = int_to_ptr.hbm [resolvable:$true] %s15
      %18 = dma.hbm_to_smem %s16, 64, [#allocation2], [#allocation5]
    $region5: #{tpu_custom_call.1} parent=1 // pred_fallthru
      _
    // Predicated region
    $region6: #{tpu_custom_call.1} parent=1 // pred_check
      _
    $region7: #{tpu_custom_call.1} parent=1 // pred_check_branch
      %20 = sbr.rel (0) target = $region9
    $region8: #{tpu_custom_call.1} parent=1 // pred_region
      %22 = vsyncadd [#allocation3], 0
      %s23 = sshll.u32 %s1, 4
      %s24 = int_to_ptr.hbm [resolvable:$true] %s23
      %s25 = sshll.u32 [#allocation6], 4
      %s26 = int_to_ptr.vmem [resolvable:$true] %s25
      %31 = dma.hbm_to_vmem [thread:$0]  %s24, 256, %s26, [#allocation3], 128, 128, 8
    $region9: #{tpu_custom_call.1} parent=1 // pred_fallthru
      _
    // Predicated region
    $region10: #{tpu_custom_call.1} parent=1 // pred_check
      _
    $region11: #{tpu_custom_call.1} parent=1 // pred_check_branch
      %33 = sbr.rel (0) target = $region13
    $region12: #{tpu_custom_call.1} parent=1 // pred_region
      %35 = dma.done [#allocation5], 64
    $region13: #{tpu_custom_call.1} parent=1 // pred_fallthru
      _
    // Predicated region
    $region14: #{tpu_custom_call.1} parent=1 // pred_check
      _
    $region15: #{tpu_custom_call.1} parent=1 // pred_check_branch
      %37 = sbr.rel (0) target = $region17
    $region16: #{tpu_custom_call.1} parent=1 // pred_region
      %39 = dma.done [#allocation3], 256
    $region17: #{tpu_custom_call.1} parent=1 // pred_fallthru
      _
    %40 = sfence
    %v41 = vld [vmem:[#allocation6] sm:$0xff]
    %v42 = vld [vmem:[#allocation6 + $0x8] sm:$0xff]
    %s43 = sld [smem:[#allocation2]]
    %s44 = sld [smem:[#allocation2 + $0x80]]
    %s45 = sld [smem:[#allocation2 + $0x100]]
    %s46 = sld [smem:[#allocation2 + $0x180]]
    %v47 = vstv %s44
    %v48 = vsub.f32 %v41, %v47
    %v49 = vsub.f32 %v42, %v47
    %v50 = vmul.f32 %v48, %v48
    %v51 = vmul.f32 %v49, %v49
    %v52 = vstv %s45
    %v53 = vmul.f32 %v50, %v52
    %v54 = vmul.f32 %v51, %v52
    %v55 = vmul.f32 %v53, 1.442695
    %v56 = vpow.pop %v55
    %v57 = vmul.f32 %v54, 1.442695
    %v58 = vpow.pop %v57
    %v59 = vstv %s43
    %v60 = vmul.f32 %v59, %v56
    %v61 = vmul.f32 %v59, %v58
    %v62 = vstv %s46
    %v63 = vmax.f32 %v60, %v62
    %v64 = vmax.f32 %v61, %v62
    %v65 = vadd.f32 %v63, 0.0
    %v66 = vadd.f32 %v64, 0.0
    %s67 = sld [smem:[#allocation2 + $0x1]]
    %s68 = sld [smem:[#allocation2 + $0x81]]
    %s69 = sld [smem:[#allocation2 + $0x101]]
    %s70 = sld [smem:[#allocation2 + $0x181]]
    %v71 = vstv %s68
    %v72 = vsub.f32 %v41, %v71
    %v73 = vsub.f32 %v42, %v71
    %v74 = vmul.f32 %v72, %v72
    %v75 = vmul.f32 %v73, %v73
    %v76 = vstv %s69
    %v77 = vmul.f32 %v74, %v76
    %v78 = vmul.f32 %v75, %v76
    %v79 = vmul.f32 %v77, 1.442695
    %v80 = vpow.pop %v79
    %v81 = vmul.f32 %v78, 1.442695
    %v82 = vpow.pop %v81
    %v83 = vstv %s67
    %v84 = vmul.f32 %v83, %v80
    %v85 = vmul.f32 %v83, %v82
    %v86 = vstv %s70
    %v87 = vmax.f32 %v84, %v86
    %v88 = vmax.f32 %v85, %v86
    %v89 = vadd.f32 %v87, 0.0
    %v90 = vadd.f32 %v88, 0.0
    %s91 = sld [smem:[#allocation2 + $0x2]]
    %s92 = sld [smem:[#allocation2 + $0x82]]
    %s93 = sld [smem:[#allocation2 + $0x102]]
    %s94 = sld [smem:[#allocation2 + $0x182]]
    %v95 = vstv %s92
    %v96 = vsub.f32 %v41, %v95
    %v97 = vsub.f32 %v42, %v95
    %v98 = vmul.f32 %v96, %v96
    %v99 = vmul.f32 %v97, %v97
    %v100 = vstv %s93
    %v101 = vmul.f32 %v98, %v100
    %v102 = vmul.f32 %v99, %v100
    %v103 = vmul.f32 %v101, 1.442695
    %v104 = vpow.pop %v103
    %v105 = vmul.f32 %v102, 1.442695
    %v106 = vpow.pop %v105
    %v107 = vstv %s91
    %v108 = vmul.f32 %v107, %v104
    %v109 = vmul.f32 %v107, %v106
    %v110 = vstv %s94
    %v111 = vmax.f32 %v108, %v110
    %v112 = vmax.f32 %v109, %v110
    %v113 = vadd.f32 %v65, %v111
    %v114 = vadd.f32 %v66, %v112
    %s115 = sld [smem:[#allocation2 + $0x3]]
    %s116 = sld [smem:[#allocation2 + $0x83]]
    %s117 = sld [smem:[#allocation2 + $0x103]]
    %s118 = sld [smem:[#allocation2 + $0x183]]
    %v119 = vstv %s116
    %v120 = vsub.f32 %v41, %v119
    %v121 = vsub.f32 %v42, %v119
    %v122 = vmul.f32 %v120, %v120
    %v123 = vmul.f32 %v121, %v121
    %v124 = vstv %s117
    %v125 = vmul.f32 %v122, %v124
    %v126 = vmul.f32 %v123, %v124
    %v127 = vmul.f32 %v125, 1.442695
    %v128 = vpow.pop %v127
    %v129 = vmul.f32 %v126, 1.442695
    %v130 = vpow.pop %v129
    %v131 = vstv %s115
    %v132 = vmul.f32 %v131, %v128
    %v133 = vmul.f32 %v131, %v130
    %v134 = vstv %s118
    %v135 = vmax.f32 %v132, %v134
    %v136 = vmax.f32 %v133, %v134
    %v137 = vadd.f32 %v89, %v135
    %v138 = vadd.f32 %v90, %v136
    %v139 = vadd.f32 %v113, %v137
    %v140 = vadd.f32 %v114, %v138
    %v141 = vlog2.pop %v139
    %v142 = vmul.f32 %v141, 0.6931472
    %v143 = vlog2.pop %v140
    %v144 = vmul.f32 %v143, 0.6931472
    %145 = vst [vmem:[#allocation7] sm:$0xff] %v142
    %146 = vst [vmem:[#allocation7 + $0x8] sm:$0xff] %v144
    // Predicated region
    $region18: #{tpu_custom_call.1} parent=1 // pred_check
      _
    $region19: #{tpu_custom_call.1} parent=1 // pred_check_branch
      %148 = sbr.rel (0) target = $region21
    $region20: #{tpu_custom_call.1} parent=1 // pred_region
      %150 = vsyncadd [#allocation4], 0
      %s151 = sshll.u32 [#allocation7], 4
      %s152 = int_to_ptr.vmem [resolvable:$true] %s151
      %s153 = sshll.u32 %s2, 4
      %s154 = int_to_ptr.hbm [resolvable:$true] %s153
      %159 = dma.vmem_to_hbm [thread:$0]  %s152, 256, %s154, [#allocation4], 128, 128, 8
    $region21: #{tpu_custom_call.1} parent=1 // pred_fallthru
      _
    // Predicated region
    $region22: #{tpu_custom_call.1} parent=1 // pred_check
      _
    $region23: #{tpu_custom_call.1} parent=1 // pred_check_branch
      %161 = sbr.rel (0) target = $region25
    $region24: #{tpu_custom_call.1} parent=1 // pred_region
      %163 = dma.done [#allocation4], 256
    $region25: #{tpu_custom_call.1} parent=1 // pred_fallthru
      _
    %164 = vsyncpa [#allocation3], 1
    %165 = vsyncpa [#allocation4], 1
    %166 = vsyncpa [#allocation5], 1

</llo_original>
